<compile_context>
chip_gen: v6e
topology: v6e:2x2x1
jax: 0.10.0
libtpu: 0.0.40
codegen_flags: <defaults>
</compile_context>

<pallas_src>
import functools

import jax
import jax.numpy as jnp
from jax.experimental import pallas as pl
from jax.experimental.pallas import tpu as pltpu

EPS = 1e-6  # LayerNorm epsilon


def _round_up(n, m):
    return ((n + m - 1) // m) * m


def _ffn_kernel(x_ref, gamma_ref, beta_ref, w1_ref, b1_ref, w2_ref, b2_ref,
                o_ref, xn_ref, acc_ref, *, d_model):
    k = pl.program_id(1)
    nk = pl.num_programs(1)

    @pl.when(k == 0)
    def _init():
        xf = x_ref[...].astype(jnp.float32)
        d_pad = xf.shape[-1]
        if d_pad == d_model:
            mu = jnp.mean(xf, axis=-1, keepdims=True)
            var = jnp.mean(jnp.square(xf - mu), axis=-1, keepdims=True)
        else:
            # Padded feature lanes are zero; exclude them from the statistics.
            lane = jax.lax.broadcasted_iota(jnp.int32, (1, d_pad), 1)
            mask = lane < d_model
            mu = jnp.sum(xf, axis=-1, keepdims=True) / d_model
            var = jnp.sum(jnp.where(mask, jnp.square(xf - mu), 0.0),
                          axis=-1, keepdims=True) / d_model
        xn = (xf - mu) * jax.lax.rsqrt(var + EPS)
        xn = xn * gamma_ref[...] + beta_ref[...]
        # Cache the normalized tile (matmul dtype) for all d_ff steps.
        xn_ref[...] = xn.astype(xn_ref.dtype)
        # Fold residual + output bias into the accumulator init.
        acc_ref[...] = xf + b2_ref[...]

    # intermediate = ReLU(xn @ W1_tile + b1_tile), bf16 inputs / f32 accumulate.
    h = jnp.dot(xn_ref[...], w1_ref[...], preferred_element_type=jnp.float32)
    h = jnp.maximum(h + b1_ref[...], 0.0)
    # TODO(synk): dropout_1 omitted (eval-mode identity).

    # output partial sum: accumulate h_tile @ W2_tile into the f32 accumulator.
    acc_ref[...] += jnp.dot(h.astype(w2_ref.dtype), w2_ref[...],
                            preferred_element_type=jnp.float32)

    @pl.when(k == nk - 1)
    def _finalize():
        # TODO(synk): dropout_2 omitted (eval-mode identity).
        o_ref[...] = acc_ref[...].astype(o_ref.dtype)


def positionwise_ffn(x, gamma, beta, w1, b1, w2, b2, *,
                     tm=256, tff=512, compute_dtype=jnp.bfloat16):
    """x: [B, L, d_model] -> [B, L, d_model]."""
    B, L, d_model = x.shape
    d_ff = w1.shape[1]
    rows = B * L

    # Lane-align feature dims (multiples of 128); pad rows to the row tile.
    d_model_p = _round_up(d_model, 128)
    d_ff_128 = _round_up(d_ff, 128)
    tff = _round_up(min(tff, d_ff_128), 128)
    d_ff_p = _round_up(d_ff_128, tff)

    tm = _round_up(min(tm, _round_up(rows, 8)), 8)
    rows_p = _round_up(rows, tm)

    # Zero-padding keeps the math exact: padded lanes of gamma/beta/b2/W are
    # zero, so they contribute nothing and padded outputs are sliced away.
    x2d = jnp.pad(x.reshape(rows, d_model),
                  ((0, rows_p - rows), (0, d_model_p - d_model)))
    gamma_p = jnp.pad(gamma, (0, d_model_p - d_model)).reshape(1, d_model_p)
    beta_p = jnp.pad(beta, (0, d_model_p - d_model)).reshape(1, d_model_p)
    b2_p = jnp.pad(b2, (0, d_model_p - d_model)).reshape(1, d_model_p)
    b1_p = jnp.pad(b1, (0, d_ff_p - d_ff)).reshape(1, d_ff_p)
    w1_p = jnp.pad(w1, ((0, d_model_p - d_model),
                        (0, d_ff_p - d_ff))).astype(compute_dtype)
    w2_p = jnp.pad(w2, ((0, d_ff_p - d_ff),
                        (0, d_model_p - d_model))).astype(compute_dtype)

    grid = (rows_p // tm, d_ff_p // tff)
    w_item = jnp.dtype(compute_dtype).itemsize
    cost = pl.CostEstimate(
        flops=4 * rows_p * d_model_p * d_ff_p,
        transcendentals=rows_p,
        bytes_accessed=(2 * rows_p * d_model_p * 4
                        + 2 * d_model_p * d_ff_p * w_item
                        + 4 * (3 * d_model_p + d_ff_p)),
    )

    out2d = pl.pallas_call(
        functools.partial(_ffn_kernel, d_model=d_model),
        out_shape=jax.ShapeDtypeStruct((rows_p, d_model_p), x.dtype),
        grid_spec=pltpu.PrefetchScalarGridSpec(
            num_scalar_prefetch=0,
            grid=grid,
            in_specs=[
                pl.BlockSpec((tm, d_model_p), lambda i, k: (i, 0)),     # x rows
                pl.BlockSpec((1, d_model_p), lambda i, k: (0, 0)),      # gamma
                pl.BlockSpec((1, d_model_p), lambda i, k: (0, 0)),      # beta
                pl.BlockSpec((d_model_p, tff), lambda i, k: (0, k)),    # W1 tile
                pl.BlockSpec((1, tff), lambda i, k: (0, k)),            # b1 tile
                pl.BlockSpec((tff, d_model_p), lambda i, k: (k, 0)),    # W2 tile
                pl.BlockSpec((1, d_model_p), lambda i, k: (0, 0)),      # b2
            ],
            out_specs=pl.BlockSpec((tm, d_model_p), lambda i, k: (i, 0)),
            scratch_shapes=[
                pltpu.VMEM((tm, d_model_p), compute_dtype),   # cached LN(x)
                pltpu.VMEM((tm, d_model_p), jnp.float32),     # output accumulator
            ],
        ),
        compiler_params=pltpu.CompilerParams(
            dimension_semantics=("parallel", "arbitrary"),
            vmem_limit_bytes=64 * 1024 * 1024,
        ),
        cost_estimate=cost,
    )(x2d, gamma_p, beta_p, w1_p, b1_p, w2_p, b2_p)

    return out2d[:rows, :d_model].reshape(B, L, d_model)


def reference_ffn(x, gamma, beta, w1, b1, w2, b2):
    xf = x.astype(jnp.float32)
    mu = jnp.mean(xf, axis=-1, keepdims=True)
    var = jnp.mean(jnp.square(xf - mu), axis=-1, keepdims=True)
    xn = (xf - mu) / jnp.sqrt(var + EPS) * gamma + beta
    h = jnp.maximum(xn @ w1 + b1, 0.0)
    y = h @ w2 + b2
    return (y + xf).astype(x.dtype)


if __name__ == "__main__":
    key = jax.random.PRNGKey(0)
    B, L, d_model, d_ff = 2, 8, 32, 64

    k_x, k_w1, k_b1, k_w2, k_b2 = jax.random.split(key, 5)
    x = jax.random.normal(k_x, (B, L, d_model), dtype=jnp.float32)

    # Weights stored pre-transposed vs. PyTorch's (out, in) Linear layout.
    w1 = jax.random.normal(k_w1, (d_model, d_ff), dtype=jnp.float32) * 0.05
    b1 = jax.random.normal(k_b1, (d_ff,), dtype=jnp.float32) * 0.01
    w2 = jax.random.normal(k_w2, (d_ff, d_model), dtype=jnp.float32) * 0.05
    b2 = jax.random.normal(k_b2, (d_model,), dtype=jnp.float32) * 0.01
    gamma = jnp.ones((d_model,), dtype=jnp.float32)   # LayerNorm weight
    beta = jnp.zeros((d_model,), dtype=jnp.float32)   # LayerNorm bias

    ref = reference_ffn(x, gamma, beta, w1, b1, w2, b2)

    # Exactness check with f32 matmul inputs.
    out_f32 = positionwise_ffn(x, gamma, beta, w1, b1, w2, b2,
                               compute_dtype=jnp.float32)
    jax.block_until_ready(out_f32)
    assert out_f32.shape == (B, L, d_model)
    assert jnp.allclose(out_f32, ref, atol=1e-4, rtol=1e-4), "f32 mismatch"

    # Production path: bf16 matmul inputs, f32 accumulation (looser tolerance).
    out_bf16 = positionwise_ffn(x, gamma, beta, w1, b1, w2, b2,
                                compute_dtype=jnp.bfloat16)
    jax.block_until_ready(out_bf16)
    assert out_bf16.shape == (B, L, d_model)
    assert jnp.allclose(out_bf16, ref, atol=5e-2, rtol=5e-2), "bf16 mismatch"

    print("KERNEL_OK")
</pallas_src>

<mosaic_0001>
module attributes {stable_mosaic.version = 11 : i64} {
  func.func @_ffn_kernel(%arg0: i32, %arg1: i32, %arg2: memref<16x128xf32, #tpu.memory_space<vmem>>, %arg3: memref<1x128xf32, #tpu.memory_space<vmem>>, %arg4: memref<1x128xf32, #tpu.memory_space<vmem>>, %arg5: memref<128x128xf32, #tpu.memory_space<vmem>>, %arg6: memref<1x128xf32, #tpu.memory_space<vmem>>, %arg7: memref<128x128xf32, #tpu.memory_space<vmem>>, %arg8: memref<1x128xf32, #tpu.memory_space<vmem>>, %arg9: memref<16x128xf32, #tpu.memory_space<vmem>>, %arg10: memref<16x128xf32, #tpu.memory_space<vmem>>, %arg11: memref<16x128xf32, #tpu.memory_space<vmem>>) attributes {dimension_semantics = [#tpu.dimension_semantics<parallel>, #tpu.dimension_semantics<arbitrary>], iteration_bounds = array<i64: 1, 1>, scalar_prefetch = 0 : i64, scratch_operands = 2 : i64, tpu.core_type = #tpu.core_type<tc>, window_params = [{transform_indices = @transform_0, window_bounds = array<i64: 16, 128>}, {pipeline_mode = #tpu.pipeline_mode<synchronous>, transform_indices = @transform_1, window_bounds = array<i64: 1, 128>}, {pipeline_mode = #tpu.pipeline_mode<synchronous>, transform_indices = @transform_2, window_bounds = array<i64: 1, 128>}, {transform_indices = @transform_3, window_bounds = array<i64: 128, 128>}, {transform_indices = @transform_4, window_bounds = array<i64: 1, 128>}, {transform_indices = @transform_5, window_bounds = array<i64: 128, 128>}, {pipeline_mode = #tpu.pipeline_mode<synchronous>, transform_indices = @transform_6, window_bounds = array<i64: 1, 128>}, {transform_indices = @transform_7, window_bounds = array<i64: 16, 128>}]} {
    %c0_i32 = arith.constant 0 : i32
    %0 = arith.cmpi eq, %arg1, %c0_i32 : i32
    %1 = arith.extui %0 : i1 to i32
    %c0_i32_0 = arith.constant 0 : i32
    %2 = arith.cmpi ne, %1, %c0_i32_0 : i32
    scf.if %2 {
      %c0_16 = arith.constant 0 : index
      %c0_17 = arith.constant 0 : index
      %19 = vector.load %arg2[%c0_16, %c0_17] : memref<16x128xf32, #tpu.memory_space<vmem>>, vector<16x128xf32>
      %20 = tpu.iota {dimensions = array<i32: 1>} : vector<1x128xi32>
      %c32_i32 = arith.constant 32 : i32
      %21 = vector.broadcast %c32_i32 : i32 to vector<1x128xi32>
      %22 = arith.cmpi slt, %20, %21 : vector<1x128xi32>
      %cst_18 = arith.constant dense<0.000000e+00> : vector<16xf32>
      %23 = vector.multi_reduction <add>, %19, %cst_18 [1] : vector<16x128xf32> to vector<16xf32>
      %24 = vector.shape_cast %23 : vector<16xf32> to vector<16x1xf32>
      %cst_19 = arith.constant 3.200000e+01 : f32
      %25 = vector.broadcast %cst_19 : f32 to vector<16x1xf32>
      %26 = arith.divf %24, %25 : vector<16x1xf32>
      %27 = vector.broadcast %26 : vector<16x1xf32> to vector<16x128xf32>
      %28 = arith.subf %19, %27 : vector<16x128xf32>
      %29 = arith.mulf %28, %28 : vector<16x128xf32>
      %cst_20 = arith.constant 0.000000e+00 : f32
      %30 = vector.shape_cast %22 : vector<1x128xi1> to vector<1x128xi1>
      %31 = vector.broadcast %30 : vector<1x128xi1> to vector<16x128xi1>
      %32 = vector.broadcast %cst_20 : f32 to vector<16x128xf32>
      %33 = arith.select %31, %29, %32 : vector<16x128xi1>, vector<16x128xf32>
      %cst_21 = arith.constant dense<0.000000e+00> : vector<16xf32>
      %34 = vector.multi_reduction <add>, %33, %cst_21 [1] : vector<16x128xf32> to vector<16xf32>
      %35 = vector.shape_cast %34 : vector<16xf32> to vector<16x1xf32>
      %cst_22 = arith.constant 3.200000e+01 : f32
      %36 = vector.broadcast %cst_22 : f32 to vector<16x1xf32>
      %37 = arith.divf %35, %36 : vector<16x1xf32>
      %38 = vector.broadcast %26 : vector<16x1xf32> to vector<16x128xf32>
      %39 = arith.subf %19, %38 : vector<16x128xf32>
      %cst_23 = arith.constant 9.99999997E-7 : f32
      %40 = vector.broadcast %cst_23 : f32 to vector<16x1xf32>
      %41 = arith.addf %37, %40 : vector<16x1xf32>
      %42 = math.rsqrt %41 : vector<16x1xf32>
      %43 = vector.broadcast %42 : vector<16x1xf32> to vector<16x128xf32>
      %44 = arith.mulf %39, %43 : vector<16x128xf32>
      %c0_24 = arith.constant 0 : index
      %c0_25 = arith.constant 0 : index
      %45 = vector.load %arg3[%c0_24, %c0_25] : memref<1x128xf32, #tpu.memory_space<vmem>>, vector<1x128xf32>
      %46 = vector.broadcast %45 : vector<1x128xf32> to vector<16x128xf32>
      %47 = arith.mulf %44, %46 : vector<16x128xf32>
      %c0_26 = arith.constant 0 : index
      %c0_27 = arith.constant 0 : index
      %48 = vector.load %arg4[%c0_26, %c0_27] : memref<1x128xf32, #tpu.memory_space<vmem>>, vector<1x128xf32>
      %49 = vector.broadcast %48 : vector<1x128xf32> to vector<16x128xf32>
      %50 = arith.addf %47, %49 : vector<16x128xf32>
      %c0_28 = arith.constant 0 : index
      %c0_29 = arith.constant 0 : index
      %51 = vector.load %arg10[%c0_28, %c0_29] : memref<16x128xf32, #tpu.memory_space<vmem>>, vector<16x128xf32>
      tpu.vector_store %arg10[%c0_28, %c0_29], %50 {strides = array<i32>} : memref<16x128xf32, #tpu.memory_space<vmem>>, vector<16x128xf32>,
      %c0_30 = arith.constant 0 : index
      %c0_31 = arith.constant 0 : index
      %52 = vector.load %arg8[%c0_30, %c0_31] : memref<1x128xf32, #tpu.memory_space<vmem>>, vector<1x128xf32>
      %53 = vector.broadcast %52 : vector<1x128xf32> to vector<16x128xf32>
      %54 = arith.addf %19, %53 : vector<16x128xf32>
      %c0_32 = arith.constant 0 : index
      %c0_33 = arith.constant 0 : index
      %55 = vector.load %arg11[%c0_32, %c0_33] : memref<16x128xf32, #tpu.memory_space<vmem>>, vector<16x128xf32>
      tpu.vector_store %arg11[%c0_32, %c0_33], %54 {strides = array<i32>} : memref<16x128xf32, #tpu.memory_space<vmem>>, vector<16x128xf32>,
    } else {
    }
    %c0 = arith.constant 0 : index
    %c0_1 = arith.constant 0 : index
    %3 = vector.load %arg10[%c0, %c0_1] : memref<16x128xf32, #tpu.memory_space<vmem>>, vector<16x128xf32>
    %c0_2 = arith.constant 0 : index
    %c0_3 = arith.constant 0 : index
    %4 = vector.load %arg5[%c0_2, %c0_3] : memref<128x128xf32, #tpu.memory_space<vmem>>, vector<128x128xf32>
    %cst = arith.constant dense<0.000000e+00> : vector<16x128xf32>
    %5 = tpu.matmul %3, %4, %cst {dimension_numbers = #tpu.dot_dimension_numbers<[1], [0], [0], [1], [0, 0, 1, 1], [], []>} : vector<16x128xf32>, vector<128x128xf32>, vector<16x128xf32> -> vector<16x128xf32>
    %c0_4 = arith.constant 0 : index
    %c0_5 = arith.constant 0 : index
    %6 = vector.load %arg6[%c0_4, %c0_5] : memref<1x128xf32, #tpu.memory_space<vmem>>, vector<1x128xf32>
    %7 = vector.broadcast %6 : vector<1x128xf32> to vector<16x128xf32>
    %8 = arith.addf %5, %7 : vector<16x128xf32>
    %cst_6 = arith.constant 0.000000e+00 : f32
    %9 = vector.broadcast %cst_6 : f32 to vector<16x128xf32>
    %10 = arith.maximumf %8, %9 : vector<16x128xf32>
    %c0_7 = arith.constant 0 : index
    %c0_8 = arith.constant 0 : index
    %11 = vector.load %arg11[%c0_7, %c0_8] : memref<16x128xf32, #tpu.memory_space<vmem>>, vector<16x128xf32>
    %c0_9 = arith.constant 0 : index
    %c0_10 = arith.constant 0 : index
    %12 = vector.load %arg7[%c0_9, %c0_10] : memref<128x128xf32, #tpu.memory_space<vmem>>, vector<128x128xf32>
    %cst_11 = arith.constant dense<0.000000e+00> : vector<16x128xf32>
    %13 = tpu.matmul %10, %12, %cst_11 {dimension_numbers = #tpu.dot_dimension_numbers<[1], [0], [0], [1], [0, 0, 1, 1], [], []>} : vector<16x128xf32>, vector<128x128xf32>, vector<16x128xf32> -> vector<16x128xf32>
    %14 = arith.addf %11, %13 : vector<16x128xf32>
    %c0_12 = arith.constant 0 : index
    %c0_13 = arith.constant 0 : index
    %15 = vector.load %arg11[%c0_12, %c0_13] : memref<16x128xf32, #tpu.memory_space<vmem>>, vector<16x128xf32>
    tpu.vector_store %arg11[%c0_12, %c0_13], %14 {strides = array<i32>} : memref<16x128xf32, #tpu.memory_space<vmem>>, vector<16x128xf32>,
    %c0_i32_14 = arith.constant 0 : i32
    %16 = arith.cmpi eq, %arg1, %c0_i32_14 : i32
    %17 = arith.extui %16 : i1 to i32
    %c0_i32_15 = arith.constant 0 : i32
    %18 = arith.cmpi ne, %17, %c0_i32_15 : i32
    scf.if %18 {
      %c0_16 = arith.constant 0 : index
      %c0_17 = arith.constant 0 : index
      %19 = vector.load %arg11[%c0_16, %c0_17] : memref<16x128xf32, #tpu.memory_space<vmem>>, vector<16x128xf32>
      %c0_18 = arith.constant 0 : index
      %c0_19 = arith.constant 0 : index
      %20 = vector.load %arg9[%c0_18, %c0_19] : memref<16x128xf32, #tpu.memory_space<vmem>>, vector<16x128xf32>
      tpu.vector_store %arg9[%c0_18, %c0_19], %19 {strides = array<i32>} : memref<16x128xf32, #tpu.memory_space<vmem>>, vector<16x128xf32>,
    } else {
    }
    return
  }
  func.func @transform_0(%arg0: i32, %arg1: i32) -> (i32, i32) {
    %c0_i32 = arith.constant 0 : i32
    %c0_i32_0 = arith.constant 0 : i32
    return %arg0, %c0_i32 : i32, i32
  }
  func.func @transform_1(%arg0: i32, %arg1: i32) -> (i32, i32) {
    %c0_i32 = arith.constant 0 : i32
    %c0_i32_0 = arith.constant 0 : i32
    %c0_i32_1 = arith.constant 0 : i32
    return %c0_i32, %c0_i32_0 : i32, i32
  }
  func.func @transform_2(%arg0: i32, %arg1: i32) -> (i32, i32) {
    %c0_i32 = arith.constant 0 : i32
    %c0_i32_0 = arith.constant 0 : i32
    %c0_i32_1 = arith.constant 0 : i32
    return %c0_i32, %c0_i32_0 : i32, i32
  }
  func.func @transform_3(%arg0: i32, %arg1: i32) -> (i32, i32) {
    %c0_i32 = arith.constant 0 : i32
    %c0_i32_0 = arith.constant 0 : i32
    return %c0_i32, %arg1 : i32, i32
  }
  func.func @transform_4(%arg0: i32, %arg1: i32) -> (i32, i32) {
    %c0_i32 = arith.constant 0 : i32
    %c0_i32_0 = arith.constant 0 : i32
    return %c0_i32, %arg1 : i32, i32
  }
  func.func @transform_5(%arg0: i32, %arg1: i32) -> (i32, i32) {
    %c0_i32 = arith.constant 0 : i32
    %c0_i32_0 = arith.constant 0 : i32
    return %arg1, %c0_i32 : i32, i32
  }
  func.func @transform_6(%arg0: i32, %arg1: i32) -> (i32, i32) {
    %c0_i32 = arith.constant 0 : i32
    %c0_i32_0 = arith.constant 0 : i32
    %c0_i32_1 = arith.constant 0 : i32
    return %c0_i32, %c0_i32_0 : i32, i32
  }
  func.func @transform_7(%arg0: i32, %arg1: i32) -> (i32, i32) {
    %c0_i32 = arith.constant 0 : i32
    %c0_i32_0 = arith.constant 0 : i32
    return %arg0, %c0_i32 : i32, i32
  }
}

</mosaic_0001>

<llo_original>
// kernel: tpu_custom_call.1
$region0: #{tpu_custom_call.1}
  #allocation0 [shape = 'u32[]', space=smem, size = 0x4, offset = 0x4, fixed_abs, tag = 'smem constant byte address 0x4 - core index']
  #allocation1 [shape = 'u32[144,128]{1,0:T(1,128)}', space=vmem, size = 0x12000, scoped, tag = 'internal scratch']
  #allocation2 [shape = 'f32[16,128]{1,0:T(8,128)}', space=vmem, size = 0x2000, scoped, tag = 'scratch operand']
  #allocation3 [shape = 'f32[16,128]{1,0:T(8,128)}', space=vmem, size = 0x2000, scoped, tag = 'scratch operand']
  %s0 = inlined_call_operand.hbm [shape: f32[16,128], index: 0, kind: input, shape index: {}]
  %s1 = inlined_call_operand.vmem [shape: f32[1,128], index: 1, kind: input, shape index: {}]
  %s2 = inlined_call_operand.vmem [shape: f32[1,128], index: 2, kind: input, shape index: {}]
  %s3 = inlined_call_operand.hbm [shape: f32[128,128], index: 3, kind: input, shape index: {}]
  %s4 = inlined_call_operand.vmem [shape: f32[1,128], index: 4, kind: input, shape index: {}]
  %s5 = inlined_call_operand.hbm [shape: f32[128,128], index: 5, kind: input, shape index: {}]
  %s6 = inlined_call_operand.vmem [shape: f32[1,128], index: 6, kind: input, shape index: {}]
  %s7 = inlined_call_operand.hbm [shape: f32[16,128], index: 7, kind: output, shape index: {}]
  %s8 = sld [smem:[#allocation0]]
  $region58: #{tpu_custom_call.1} parent=0
    _
  %s10 = ssub.s32 1, %s8
  %s11 = scalar_select 0, %s10, %s8
  $region1: #{tpu_custom_call.1} parent=0
    #allocation4 [shape = 'u8[8192]{0}', space=vmem, size = 0x2000, scoped, tag = 'input window, operand 0, single buffered']
    #allocation5 [shape = 's32[1]{0}', space=sflag, size = 0x4, scoped, tag = 'scoped memory for tpu_custom_call.1']
    #allocation6 [shape = 's32[1]{0}', space=sflag, size = 0x4, scoped, tag = 'scoped memory for tpu_custom_call.1']
    #allocation7 [shape = 'u8[65536]{0}', space=vmem, size = 0x10000, scoped, tag = 'input window, operand 3, single buffered']
    #allocation8 [shape = 's32[1]{0}', space=sflag, size = 0x4, scoped, tag = 'scoped memory for tpu_custom_call.1']
    #allocation9 [shape = 'u8[65536]{0}', space=vmem, size = 0x10000, scoped, tag = 'input window, operand 5, single buffered']
    #allocation10 [shape = 'u8[8192]{0}', space=vmem, size = 0x2000, scoped, tag = 'output window, operand 0, single buffered']
    %12 = vsyncpa [#allocation5], 0
    %13 = vsyncpa [#allocation8], 0
    %14 = vsyncpa [#allocation6], 0
    // Predicated region
    $region2: #{tpu_custom_call.1} parent=1 // pred_check
      _
    $region3: #{tpu_custom_call.1} parent=1 // pred_check_branch
      %16 = sbr.rel (0) target = $region5
    $region4: #{tpu_custom_call.1} parent=1 // pred_region
      %s18 = ssub.s32 256, 256
      %19 = vsyncadd [#allocation5], %s18
      %s20 = sshll.u32 [#allocation4], 4
      %s21 = int_to_ptr.vmem [resolvable:$true] %s20
      %26 = dma.hbm_to_vmem [thread:$0]  %s0, 256, %s21, [#allocation5], 128, 128, 8
    $region5: #{tpu_custom_call.1} parent=1 // pred_fallthru
      _
    // Predicated region
    $region6: #{tpu_custom_call.1} parent=1 // pred_check
      _
    $region7: #{tpu_custom_call.1} parent=1 // pred_check_branch
      %28 = sbr.rel (0) target = $region9
    $region8: #{tpu_custom_call.1} parent=1 // pred_region
      _
    $region9: #{tpu_custom_call.1} parent=1 // pred_fallthru
      _
    // Predicated region
    $region10: #{tpu_custom_call.1} parent=1 // pred_check
      _
    $region11: #{tpu_custom_call.1} parent=1 // pred_check_branch
      %30 = sbr.rel (0) target = $region13
    $region12: #{tpu_custom_call.1} parent=1 // pred_region
      _
    $region13: #{tpu_custom_call.1} parent=1 // pred_fallthru
      _
    // Predicated region
    $region14: #{tpu_custom_call.1} parent=1 // pred_check
      _
    $region15: #{tpu_custom_call.1} parent=1 // pred_check_branch
      %32 = sbr.rel (0) target = $region17
    $region16: #{tpu_custom_call.1} parent=1 // pred_region
      %s34 = ssub.s32 2048, 2048
      %35 = vsyncadd [#allocation8], %s34
      %s36 = sshll.u32 [#allocation7], 4
      %s37 = int_to_ptr.vmem [resolvable:$true] %s36
      %42 = dma.hbm_to_vmem [thread:$0]  %s3, 2048, %s37, [#allocation8], 128, 128, 8
    $region17: #{tpu_custom_call.1} parent=1 // pred_fallthru
      _
    // Predicated region
    $region18: #{tpu_custom_call.1} parent=1 // pred_check
      _
    $region19: #{tpu_custom_call.1} parent=1 // pred_check_branch
      %44 = sbr.rel (0) target = $region21
    $region20: #{tpu_custom_call.1} parent=1 // pred_region
      _
    $region21: #{tpu_custom_call.1} parent=1 // pred_fallthru
      _
    // Predicated region
    $region22: #{tpu_custom_call.1} parent=1 // pred_check
      _
    $region23: #{tpu_custom_call.1} parent=1 // pred_check_branch
      %46 = sbr.rel (0) target = $region25
    $region24: #{tpu_custom_call.1} parent=1 // pred_region
      %s48 = ssub.s32 2048, 2048
      %49 = vsyncadd [#allocation8], %s48
      %s50 = sshll.u32 [#allocation9], 4
      %s51 = int_to_ptr.vmem [resolvable:$true] %s50
      %56 = dma.hbm_to_vmem [thread:$0]  %s5, 2048, %s51, [#allocation8], 128, 128, 8
    $region25: #{tpu_custom_call.1} parent=1 // pred_fallthru
      _
    // Predicated region
    $region26: #{tpu_custom_call.1} parent=1 // pred_check
      _
    $region27: #{tpu_custom_call.1} parent=1 // pred_check_branch
      %58 = sbr.rel (0) target = $region29
    $region28: #{tpu_custom_call.1} parent=1 // pred_region
      _
    $region29: #{tpu_custom_call.1} parent=1 // pred_fallthru
      _
    // Predicated region
    $region30: #{tpu_custom_call.1} parent=1 // pred_check
      _
    $region31: #{tpu_custom_call.1} parent=1 // pred_check_branch
      %60 = sbr.rel (0) target = $region33
    $region32: #{tpu_custom_call.1} parent=1 // pred_region
      %61 = dma.done [#allocation5], 256
    $region33: #{tpu_custom_call.1} parent=1 // pred_fallthru
      _
    // Predicated region
    $region34: #{tpu_custom_call.1} parent=1 // pred_check
      _
    $region35: #{tpu_custom_call.1} parent=1 // pred_check_branch
      %63 = sbr.rel (0) target = $region37
    $region36: #{tpu_custom_call.1} parent=1 // pred_region
      %64 = dma.done [#allocation8], 2048
    $region37: #{tpu_custom_call.1} parent=1 // pred_fallthru
      _
    // Predicated region
    $region38: #{tpu_custom_call.1} parent=1 // pred_check
      _
    $region39: #{tpu_custom_call.1} parent=1 // pred_check_branch
      %66 = sbr.rel (0) target = $region41
    $region40: #{tpu_custom_call.1} parent=1 // pred_region
      %67 = dma.done [#allocation8], 2048
    $region41: #{tpu_custom_call.1} parent=1 // pred_fallthru
      _
    %p68 = scmp.eq.s32.totalorder 0, 0
    // Predicated region
    $region42: #{tpu_custom_call.1} parent=1 // pred_check
      %p69 = pneg %p68
    $region43: #{tpu_custom_call.1} parent=1 // pred_check_branch
      %71 = sbr.rel (%p69) target = $region45
    $region44: #{tpu_custom_call.1} parent=1 // pred_region
      %v72 = vld [vmem:[#allocation4] sm:$0xff]
      %v73 = vld [vmem:[#allocation4 + $0x8] sm:$0xff]
      %v74 = vlaneseq
      %v75 = vand.u32 %v74, 127
      %vm76 = vcmp.lt.s32.totalorder %v75, 32
      %77 = vadd.xlane.f32.xlu0 %v72
      %v78 = vpop.xlane.xlu0 %77
      %79 = vadd.xlane.f32.xlu0 %v73
      %v80 = vpop.xlane.xlu0 %79
      %v81 = vrcp.pop 32.0
      %v82 = vmul.f32 %v78, %v81
      %v83 = vmul.f32 %v80, %v81
      %v84 = vsub.f32 %v72, %v82
      %v85 = vsub.f32 %v73, %v83
      %v86 = vmul.f32 %v84, %v84
      %v87 = vmul.f32 %v85, %v85
      %v88 = vsel %vm76, 1, 0
      %vm89 = vcmp.eq.s32.totalorder %v88, 1
      %v90 = vsel %vm89, %v86, 0.0
      %v91 = vsel %vm89, %v87, 0.0
      %92 = vadd.xlane.f32.xlu0 %v90
      %v93 = vpop.xlane.xlu0 %92
      %94 = vadd.xlane.f32.xlu0 %v91
      %v95 = vpop.xlane.xlu0 %94
      %v96 = vmul.f32 %v93, %v81
      %v97 = vmul.f32 %v95, %v81
      %v98 = vadd.f32 %v96, 1e-06
      %v99 = vadd.f32 %v97, 1e-06
      %v100 = vrsqrt.pop %v98
      %v101 = vrsqrt.pop %v99
      %v102 = vmul.f32 %v84, %v100
      %v103 = vmul.f32 %v85, %v101
      %v104 = vld [vmem:[%s1] sm:$0x1]
      %v106 = vlaneseq
      %v107 = vshrl.u32 %v106, 7
      %v108 = vsub.s32 0, %v107
      %v109 = vrot.slane %v104, %v108
      %v111 = vmul.f32 %v102, %v109
      %v112 = vmul.f32 %v103, %v109
      %v113 = vld [vmem:[%s2] sm:$0x1]
      %v115 = vlaneseq
      %v116 = vshrl.u32 %v115, 7
      %v117 = vsub.s32 0, %v116
      %v118 = vrot.slane %v113, %v117
      %v120 = vadd.f32 %v111, %v118
      %v121 = vadd.f32 %v112, %v118
      %122 = vst [vmem:[#allocation2] sm:$0xff] %v120
      %123 = vst [vmem:[#allocation2 + $0x8] sm:$0xff] %v121
      %v124 = vld [vmem:[%s6] sm:$0x1]
      %v126 = vlaneseq
      %v127 = vshrl.u32 %v126, 7
      %v128 = vsub.s32 0, %v127
      %v129 = vrot.slane %v124, %v128
      %v131 = vadd.f32 %v72, %v129
      %v132 = vadd.f32 %v73, %v129
      %133 = vst [vmem:[#allocation3] sm:$0xff] %v131
      %134 = vst [vmem:[#allocation3 + $0x8] sm:$0xff] %v132
    $region45: #{tpu_custom_call.1} parent=1 // pred_fallthru
      _
    %v135 = vld [vmem:[#allocation2] sm:$0xff]
    %v136 = vld [vmem:[#allocation2 + $0x8] sm:$0xff]
    %v137 = vld [vmem:[#allocation7] sm:$0xff]
    %v138 = vld [vmem:[#allocation7 + $0x8] sm:$0xff]
    %v139 = vld [vmem:[#allocation7 + $0x10] sm:$0xff]
    %v140 = vld [vmem:[#allocation7 + $0x18] sm:$0xff]
    %v141 = vld [vmem:[#allocation7 + $0x20] sm:$0xff]
    %v142 = vld [vmem:[#allocation7 + $0x28] sm:$0xff]
    %v143 = vld [vmem:[#allocation7 + $0x30] sm:$0xff]
    %v144 = vld [vmem:[#allocation7 + $0x38] sm:$0xff]
    %v145 = vld [vmem:[#allocation7 + $0x40] sm:$0xff]
    %v146 = vld [vmem:[#allocation7 + $0x48] sm:$0xff]
    %v147 = vld [vmem:[#allocation7 + $0x50] sm:$0xff]
    %v148 = vld [vmem:[#allocation7 + $0x58] sm:$0xff]
    %v149 = vld [vmem:[#allocation7 + $0x60] sm:$0xff]
    %v150 = vld [vmem:[#allocation7 + $0x68] sm:$0xff]
    %v151 = vld [vmem:[#allocation7 + $0x70] sm:$0xff]
    %v152 = vld [vmem:[#allocation7 + $0x78] sm:$0xff]
    %v153 = vld [vmem:[%s4] sm:$0x1]
    %v155 = vlaneseq
    %v156 = vshrl.u32 %v155, 7
    %v157 = vsub.s32 0, %v156
    %v158 = vrot.slane %v153, %v157
    %160 = vmatprep.subr.mxu0 0.0
    %161 = vmatpush1.msra.mxu0 %v152
    %162 = vmatprep.subr.mxu0 0.0
    %163 = vmatpush1.msra.mxu0 %v151
    %164 = vmatprep.subr.mxu0 0.0
    %165 = vmatpush1.msra.mxu0 %v150
    %166 = vmatprep.subr.mxu0 0.0
    %167 = vmatpush1.msra.mxu0 %v149
    %168 = vmatprep.subr.mxu0 0.0
    %169 = vmatpush1.msra.mxu0 %v148
    %170 = vmatprep.subr.mxu0 0.0
    %171 = vmatpush1.msra.mxu0 %v147
    %172 = vmatprep.subr.mxu0 0.0
    %173 = vmatpush1.msra.mxu0 %v146
    %174 = vmatprep.subr.mxu0 0.0
    %175 = vmatpush1.msra.mxu0 %v145
    %176 = vmatprep.subr.mxu0 0.0
    %177 = vmatpush1.msra.mxu0 %v144
    %178 = vmatprep.subr.mxu0 0.0
    %179 = vmatpush1.msra.mxu0 %v143
    %180 = vmatprep.subr.mxu0 0.0
    %181 = vmatpush1.msra.mxu0 %v142
    %182 = vmatprep.subr.mxu0 0.0
    %183 = vmatpush1.msra.mxu0 %v141
    %184 = vmatprep.subr.mxu0 0.0
    %185 = vmatpush1.msra.mxu0 %v140
    %186 = vmatprep.subr.mxu0 0.0
    %187 = vmatpush1.msra.mxu0 %v139
    %188 = vmatprep.subr.mxu0 0.0
    %189 = vmatpush1.msra.mxu0 %v138
    %190 = vmatprep.subr.mxu0 0.0
    %191 = vmatpush1.msra.mxu0 %v137
    %192 = vmatprep.subr.mxu0 0.0
    %193 = vmatpush2.msra.mxu0 0.0
    %194 = vmatprep.subr.mxu0 0.0
    %195 = vmatpush2.msra.mxu0 0.0
    %196 = vmatprep.subr.mxu0 0.0
    %197 = vmatpush2.msra.mxu0 0.0
    %198 = vmatprep.subr.mxu0 0.0
    %199 = vmatpush2.msra.mxu0 0.0
    %200 = vmatprep.subr.mxu0 0.0
    %201 = vmatpush2.msra.mxu0 0.0
    %202 = vmatprep.subr.mxu0 0.0
    %203 = vmatpush2.msra.mxu0 0.0
    %204 = vmatprep.subr.mxu0 0.0
    %205 = vmatpush2.msra.mxu0 0.0
    %206 = vmatprep.subr.mxu0 0.0
    %207 = vmatpush2.msra.mxu0 0.0
    %208 = vmatprep.subr.mxu0 0.0
    %209 = vmatpush2.msra.mxu0 0.0
    %210 = vmatprep.subr.mxu0 0.0
    %211 = vmatpush2.msra.mxu0 0.0
    %212 = vmatprep.subr.mxu0 0.0
    %213 = vmatpush2.msra.mxu0 0.0
    %214 = vmatprep.subr.mxu0 0.0
    %215 = vmatpush2.msra.mxu0 0.0
    %216 = vmatprep.subr.mxu0 0.0
    %217 = vmatpush2.msra.mxu0 0.0
    %218 = vmatprep.subr.mxu0 0.0
    %219 = vmatpush2.msra.mxu0 0.0
    %220 = vmatprep.subr.mxu0 0.0
    %221 = vmatpush2.msra.mxu0 0.0
    %222 = vmatprep.subr.mxu0 0.0
    %223 = vmatpush2.msra.mxu0 0.0
    %224 = vmatprep.mubr.f32.mxu0 0.0
    %225 = vmatmul.mubr.f32.gmra.mxu0 %v135
    %v226 = vpop.f32.mrf.mxu0
    %v227 = vadd.f32 %v158, %v226
    %v228 = vpop.f32.mrf.mxu0
    %229 = vmatprep.mubr.f32.mxu0 0.0
    %230 = vmatmul.mubr.f32.gmra.mxu0 %v136
    %v231 = vpop.f32.mrf.mxu0
    %v232 = vadd.f32 %v158, %v231
    %v233 = vpop.f32.mrf.mxu0
    %234 = vdwg.mxu0
    %v235 = vmax.f32 %v227, 0.0
    %v236 = vmax.f32 %v232, 0.0
    %v237 = vld [vmem:[#allocation3] sm:$0xff]
    %v238 = vld [vmem:[#allocation3 + $0x8] sm:$0xff]
    %v239 = vld [vmem:[#allocation9] sm:$0xff]
    %v240 = vld [vmem:[#allocation9 + $0x8] sm:$0xff]
    %v241 = vld [vmem:[#allocation9 + $0x10] sm:$0xff]
    %v242 = vld [vmem:[#allocation9 + $0x18] sm:$0xff]
    %v243 = vld [vmem:[#allocation9 + $0x20] sm:$0xff]
    %v244 = vld [vmem:[#allocation9 + $0x28] sm:$0xff]
    %v245 = vld [vmem:[#allocation9 + $0x30] sm:$0xff]
    %v246 = vld [vmem:[#allocation9 + $0x38] sm:$0xff]
    %v247 = vld [vmem:[#allocation9 + $0x40] sm:$0xff]
    %v248 = vld [vmem:[#allocation9 + $0x48] sm:$0xff]
    %v249 = vld [vmem:[#allocation9 + $0x50] sm:$0xff]
    %v250 = vld [vmem:[#allocation9 + $0x58] sm:$0xff]
    %v251 = vld [vmem:[#allocation9 + $0x60] sm:$0xff]
    %v252 = vld [vmem:[#allocation9 + $0x68] sm:$0xff]
    %v253 = vld [vmem:[#allocation9 + $0x70] sm:$0xff]
    %v254 = vld [vmem:[#allocation9 + $0x78] sm:$0xff]
    %255 = vmatprep.subr.mxu0 0.0
    %256 = vmatpush1.msra.mxu0 %v254
    %257 = vmatprep.subr.mxu0 0.0
    %258 = vmatpush1.msra.mxu0 %v253
    %259 = vmatprep.subr.mxu0 0.0
    %260 = vmatpush1.msra.mxu0 %v252
    %261 = vmatprep.subr.mxu0 0.0
    %262 = vmatpush1.msra.mxu0 %v251
    %263 = vmatprep.subr.mxu0 0.0
    %264 = vmatpush1.msra.mxu0 %v250
    %265 = vmatprep.subr.mxu0 0.0
    %266 = vmatpush1.msra.mxu0 %v249
    %267 = vmatprep.subr.mxu0 0.0
    %268 = vmatpush1.msra.mxu0 %v248
    %269 = vmatprep.subr.mxu0 0.0
    %270 = vmatpush1.msra.mxu0 %v247
    %271 = vmatprep.subr.mxu0 0.0
    %272 = vmatpush1.msra.mxu0 %v246
    %273 = vmatprep.subr.mxu0 0.0
    %274 = vmatpush1.msra.mxu0 %v245
    %275 = vmatprep.subr.mxu0 0.0
    %276 = vmatpush1.msra.mxu0 %v244
    %277 = vmatprep.subr.mxu0 0.0
    %278 = vmatpush1.msra.mxu0 %v243
    %279 = vmatprep.subr.mxu0 0.0
    %280 = vmatpush1.msra.mxu0 %v242
    %281 = vmatprep.subr.mxu0 0.0
    %282 = vmatpush1.msra.mxu0 %v241
    %283 = vmatprep.subr.mxu0 0.0
    %284 = vmatpush1.msra.mxu0 %v240
    %285 = vmatprep.subr.mxu0 0.0
    %286 = vmatpush1.msra.mxu0 %v239
    %287 = vmatprep.subr.mxu0 0.0
    %288 = vmatpush2.msra.mxu0 0.0
    %289 = vmatprep.subr.mxu0 0.0
    %290 = vmatpush2.msra.mxu0 0.0
    %291 = vmatprep.subr.mxu0 0.0
    %292 = vmatpush2.msra.mxu0 0.0
    %293 = vmatprep.subr.mxu0 0.0
    %294 = vmatpush2.msra.mxu0 0.0
    %295 = vmatprep.subr.mxu0 0.0
    %296 = vmatpush2.msra.mxu0 0.0
    %297 = vmatprep.subr.mxu0 0.0
    %298 = vmatpush2.msra.mxu0 0.0
    %299 = vmatprep.subr.mxu0 0.0
    %300 = vmatpush2.msra.mxu0 0.0
    %301 = vmatprep.subr.mxu0 0.0
    %302 = vmatpush2.msra.mxu0 0.0
    %303 = vmatprep.subr.mxu0 0.0
    %304 = vmatpush2.msra.mxu0 0.0
    %305 = vmatprep.subr.mxu0 0.0
    %306 = vmatpush2.msra.mxu0 0.0
    %307 = vmatprep.subr.mxu0 0.0
    %308 = vmatpush2.msra.mxu0 0.0
    %309 = vmatprep.subr.mxu0 0.0
    %310 = vmatpush2.msra.mxu0 0.0
    %311 = vmatprep.subr.mxu0 0.0
    %312 = vmatpush2.msra.mxu0 0.0
    %313 = vmatprep.subr.mxu0 0.0
    %314 = vmatpush2.msra.mxu0 0.0
    %315 = vmatprep.subr.mxu0 0.0
    %316 = vmatpush2.msra.mxu0 0.0
    %317 = vmatprep.subr.mxu0 0.0
    %318 = vmatpush2.msra.mxu0 0.0
    %319 = vmatprep.mubr.f32.mxu0 0.0
    %320 = vmatmul.mubr.f32.gmra.mxu0 %v235
    %v321 = vpop.f32.mrf.mxu0
    %v322 = vadd.f32 0.0, %v321
    %v323 = vpop.f32.mrf.mxu0
    %324 = vmatprep.mubr.f32.mxu0 0.0
    %325 = vmatmul.mubr.f32.gmra.mxu0 %v236
    %v326 = vpop.f32.mrf.mxu0
    %v327 = vadd.f32 0.0, %v326
    %v328 = vpop.f32.mrf.mxu0
    %329 = vdwg.mxu0
    %v330 = vadd.f32 %v237, %v322
    %v331 = vadd.f32 %v238, %v327
    %332 = vst [vmem:[#allocation3] sm:$0xff] %v330
    %333 = vst [vmem:[#allocation3 + $0x8] sm:$0xff] %v331
    // Predicated region
    $region46: #{tpu_custom_call.1} parent=1 // pred_check
      %p334 = pneg %p68
    $region47: #{tpu_custom_call.1} parent=1 // pred_check_branch
      %336 = sbr.rel (%p334) target = $region49
    $region48: #{tpu_custom_call.1} parent=1 // pred_region
      %v337 = vld [vmem:[#allocation3] sm:$0xff]
      %v338 = vld [vmem:[#allocation3 + $0x8] sm:$0xff]
      %339 = vst [vmem:[#allocation10] sm:$0xff] %v337
      %340 = vst [vmem:[#allocation10 + $0x8] sm:$0xff] %v338
    $region49: #{tpu_custom_call.1} parent=1 // pred_fallthru
      _
    // Predicated region
    $region50: #{tpu_custom_call.1} parent=1 // pred_check
      _
    $region51: #{tpu_custom_call.1} parent=1 // pred_check_branch
      %342 = sbr.rel (0) target = $region53
    $region52: #{tpu_custom_call.1} parent=1 // pred_region
      %s344 = ssub.s32 256, 256
      %345 = vsyncadd [#allocation6], %s344
      %s346 = sshll.u32 [#allocation10], 4
      %s347 = int_to_ptr.vmem [resolvable:$true] %s346
      %352 = dma.vmem_to_hbm [thread:$0]  %s347, 256, %s7, [#allocation6], 128, 128, 8
    $region53: #{tpu_custom_call.1} parent=1 // pred_fallthru
      _
    // Predicated region
    $region54: #{tpu_custom_call.1} parent=1 // pred_check
      _
    $region55: #{tpu_custom_call.1} parent=1 // pred_check_branch
      %354 = sbr.rel (0) target = $region57
    $region56: #{tpu_custom_call.1} parent=1 // pred_region
      %355 = dma.done [#allocation6], 256
    $region57: #{tpu_custom_call.1} parent=1 // pred_fallthru
      _
    %356 = vsyncpa [#allocation5], 1
    %357 = vsyncpa [#allocation8], 1
    %358 = vsyncpa [#allocation6], 1

</llo_original>
